<compile_context>
chip_gen: v6e
topology: v6e:2x2x1
jax: 0.10.0
libtpu: 0.0.40
codegen_flags: <defaults>
</compile_context>

<pallas_src>
import functools

import jax
import jax.numpy as jnp
import numpy as np
from jax import lax
from jax.experimental import pallas as pl
from jax.experimental.pallas import tpu as pltpu

_EPS = 1e-12      # F.normalize eps
_NEG_BIG = -1e30  # finite "minus infinity" (avoids 0 * inf = NaN)
_LANE = 128


def _supcon_row_kernel(feat_blk_ref, feat_all_ref, lab_col_ref, lab_row_ref,
                       num_pos_ref, self_sim_ref, loss_ref, valid_ref, *,
                       num_real, num_padded, temperature,
                       scale_by_temperature):
    # Gram row-slab on the MXU; contract D on both operands (no transpose).
    sim = lax.dot_general(
        feat_blk_ref[...], feat_all_ref[...],
        dimension_numbers=(((1,), (1,)), ((), ())),
        preferred_element_type=jnp.float32,
    )                                     # (TM, Bp) == anchor_dot_contrast / T

    # Mask padded contrast columns (compile-time branch; absent when Bp == B).
    if num_padded:
        col_ids = lax.broadcasted_iota(jnp.int32, sim.shape, 1)
        sim = jnp.where(col_ids < num_real, sim, _NEG_BIG)

    # Boolean label-equality mask (includes the diagonal; the self term is
    # removed analytically below since mask_ii == 1 always).
    pos_mask = lab_col_ref[...] == lab_row_ref[...]       # (TM, Bp) bool
    num_pos = num_pos_ref[...]                            # (TM, 1) excl. self
    self_sim = self_sim_ref[...]                          # (TM, 1) == sim_ii

    logits_max = jnp.max(sim, axis=1, keepdims=True)      # (TM, 1)
    exp_logits = jnp.exp(sim - logits_max)                # (TM, Bp)  (EUP)
    self_logit = self_sim - logits_max                    # (TM, 1)

    # denominator_i = sum_{j != i} exp(sim_ij - max_i)
    denom = jnp.sum(exp_logits, axis=1, keepdims=True) - jnp.exp(self_logit)

    # sum over positives (self excluded analytically), in max-shifted space:
    #   sum_{j in P(i)} (sim_ij - max_i)
    pos_sim_sum = jnp.sum(jnp.where(pos_mask, sim, 0.0), axis=1, keepdims=True)
    pos_logit_sum = (pos_sim_sum - self_sim) - num_pos * logits_max

    has_pos = num_pos > 0.0
    per_row = jnp.where(
        has_pos,
        (pos_logit_sum - num_pos * jnp.log(denom)) / jnp.maximum(num_pos, 1.0),
        0.0)

    loss_rows = -per_row
    if scale_by_temperature:
        loss_rows = loss_rows * temperature

    loss_ref[...] = loss_rows                # already 0 for invalid/padded rows
    valid_ref[...] = has_pos.astype(jnp.float32)


def supcon_loss(features, labels, temperature=0.5, scale_by_temperature=True,
                use_bf16_matmul=True):
    """features: [B, D] float, labels: [B] int — returns scalar loss."""
    features = jnp.asarray(features, dtype=jnp.float32)
    labels = jnp.asarray(labels, dtype=jnp.int32).reshape(-1)
    B, D = features.shape

    # --- F.normalize(features, p=2, dim=1), with 1/sqrt(T) folded in -------
    norm = jnp.sqrt(jnp.sum(features * features, axis=1, keepdims=True))
    fn = (features / jnp.maximum(norm, _EPS)) * np.float32(
        1.0 / np.sqrt(temperature))

    # --- hardware-aware tiling ---------------------------------------------
    try:
        vmem_cap = int(pltpu.get_tpu_info().vmem_capacity_bytes)
    except Exception:
        vmem_cap = 64 << 20                 # conservative (v7x per-TC VMEM)
    usable_vmem = max(vmem_cap - (8 << 20), 16 << 20)

    bytes_f = 2 if use_bf16_matmul else 4
    Dp = ((D + _LANE - 1) // _LANE) * _LANE

    def vmem_est(tm, bp):
        # resident contrast (single-buffered) + double-buffered row block
        # + ~4 live (tm, bp) f32 slabs + small per-row inputs/outputs.
        return (bp * Dp * bytes_f + 2 * tm * Dp * bytes_f + 4 * tm * bp * 4
                + 4 * bp + 2 * (bp + 20 * tm) * 4)

    if B < 128:
        TM = ((B + 7) // 8) * 8             # single tile, one grid step
    else:
        TM = 128
        bp256 = ((B + 255) // 256) * 256    # match the 256-wide v6e/v7x MXU
        if vmem_est(256, bp256) <= int(0.7 * usable_vmem):
            TM = 256
    Bp = ((B + TM - 1) // TM) * TM
    n_blocks = Bp // TM
    num_padded = Bp - B

    # TODO(synk): if vmem_est(TM, Bp) exceeds usable_vmem (very large B),
    # switch to a flash-style column-tiled online-softmax kernel.

    if Dp != D or num_padded:
        fn = jnp.pad(fn, ((0, num_padded), (0, Dp - D)))
    if num_padded:
        # unique sentinel labels (> all real labels) -> padded rows never match
        # anything and never count as positives/valid anchors.
        sentinels = jnp.max(labels) + 1 + jnp.arange(num_padded, dtype=jnp.int32)
        labels_p = jnp.concatenate([labels, sentinels])
    else:
        labels_p = labels

    mm_dtype = jnp.bfloat16 if use_bf16_matmul else jnp.float32
    fn_mm = fn.astype(mm_dtype)

    # Per-row statistics hoisted out of the kernel:
    #   num_pos_i  = |{j != i : label_j == label_i}|  (labels only)
    #   self_sim_i = sim_ii, computed from the same values the MXU sees.
    num_pos = (jnp.sum((labels[:, None] == labels[None, :]).astype(jnp.float32),
                       axis=1) - 1.0)
    num_pos = jnp.pad(num_pos, (0, num_padded)).reshape(Bp, 1)
    fn_diag = fn_mm.astype(jnp.float32)
    self_sim = jnp.sum(fn_diag * fn_diag, axis=1, keepdims=True)     # (Bp, 1)

    lab_col = labels_p.reshape(Bp, 1)
    lab_row = labels_p.reshape(1, Bp)

    kernel = functools.partial(
        _supcon_row_kernel,
        num_real=B,
        num_padded=num_padded,
        temperature=float(temperature),
        scale_by_temperature=bool(scale_by_temperature),
    )

    est = vmem_est(TM, Bp)
    vmem_limit = int(min(max(2 * est, 16 << 20), usable_vmem))

    def _call(single_buffer_consts):
        # Constant-index inputs never change block index across the grid, so a
        # second pipeline buffer is pure VMEM waste.
        pm = dict(pipeline_mode=pl.Buffered(1)) if single_buffer_consts else {}
        in_specs = [
            pl.BlockSpec((TM, Dp), lambda i: (i, 0)),         # anchor rows
            pl.BlockSpec((Bp, Dp), lambda i: (0, 0), **pm),   # resident contrast
            pl.BlockSpec((TM, 1), lambda i: (i, 0)),          # labels (column)
            pl.BlockSpec((1, Bp), lambda i: (0, 0), **pm),    # labels (row)
            pl.BlockSpec((TM, 1), lambda i: (i, 0)),          # num positives
            pl.BlockSpec((TM, 1), lambda i: (i, 0)),          # self similarity
        ]
        out_specs = [
            pl.BlockSpec((TM, 1), lambda i: (i, 0)),
            pl.BlockSpec((TM, 1), lambda i: (i, 0)),
        ]
        return pl.pallas_call(
            kernel,
            grid=(n_blocks,),
            in_specs=in_specs,
            out_specs=out_specs,
            out_shape=[
                jax.ShapeDtypeStruct((Bp, 1), jnp.float32),
                jax.ShapeDtypeStruct((Bp, 1), jnp.float32),
            ],
            compiler_params=pltpu.CompilerParams(
                dimension_semantics=("parallel",),
                vmem_limit_bytes=vmem_limit,
            ),
        )(fn_mm, fn_mm, lab_col, lab_row, num_pos, self_sim)

    try:
        loss_rows, valid = _call(True)
    except Exception:
        # TODO(synk): drop this fallback once pl.Buffered(1) single-buffering
        # of constant-index inputs is guaranteed on all deployed jax versions.
        loss_rows, valid = _call(False)

    # Mean over valid anchors (matches the reference; NaN if no valid anchor).
    return jnp.sum(loss_rows) / jnp.sum(valid)


def supcon_loss_ref(features, labels, temperature=0.5,
                    scale_by_temperature=True):
    """Pure-JAX reference matching the PyTorch module semantics."""
    f = features.astype(jnp.float32)
    B = f.shape[0]
    norm = jnp.sqrt(jnp.sum(f * f, axis=1, keepdims=True))
    fnorm = f / jnp.maximum(norm, _EPS)
    sim = (fnorm @ fnorm.T) / temperature
    mask = (labels[:, None] == labels[None, :]).astype(jnp.float32)
    logits_mask = 1.0 - jnp.eye(B, dtype=jnp.float32)
    positives_mask = mask * logits_mask
    negatives_mask = 1.0 - mask
    logits = sim - jnp.max(sim, axis=1, keepdims=True)
    exp_logits = jnp.exp(logits)
    num_pos = jnp.sum(positives_mask, axis=1)
    denom = (jnp.sum(exp_logits * negatives_mask, axis=1, keepdims=True)
             + jnp.sum(exp_logits * positives_mask, axis=1, keepdims=True))
    log_probs = logits - jnp.log(denom)
    row_sum = jnp.sum(log_probs * positives_mask, axis=1)
    valid = num_pos > 0
    per_row = jnp.where(valid, row_sum / jnp.maximum(num_pos, 1.0), 0.0)
    loss_rows = -per_row
    if scale_by_temperature:
        loss_rows = loss_rows * temperature
    return jnp.sum(loss_rows * valid) / jnp.sum(valid.astype(jnp.float32))


if __name__ == "__main__":
    key = jax.random.PRNGKey(0)
    k1, k2 = jax.random.split(key)

    # Small single-tile case (B < 128 -> one grid step, TM = padded B).
    # Labels 3 and 4 are singleton classes -> exercises the num_positives>0
    # filter; B=12 exercises row/column padding (12 -> 16).
    B, D = 12, 32
    features = jax.random.normal(k1, (B, D), dtype=jnp.float32)
    labels = jnp.array([0, 1, 0, 2, 1, 0, 3, 2, 1, 2, 0, 4], dtype=jnp.int32)
    ref = supcon_loss_ref(features, labels)

    # Default path: bf16 MXU inputs, f32 accumulation.
    loss_bf16 = supcon_loss(features, labels)
    jax.block_until_ready(loss_bf16)
    np.testing.assert_allclose(np.asarray(loss_bf16), np.asarray(ref),
                               rtol=5e-2, atol=5e-2)

    # Full-f32 matmul path (tight tolerance).
    loss_f32 = supcon_loss(features, labels, use_bf16_matmul=False)
    jax.block_until_ready(loss_f32)
    np.testing.assert_allclose(np.asarray(loss_f32), np.asarray(ref),
                               rtol=1e-5, atol=1e-5)

    # Multi-block case (B >= 128 -> TM in {128, 256}, >1 grid step), exercising
    # the single-buffered resident contrast across grid iterations.
    B2, D2 = 300, 32
    features2 = jax.random.normal(k2, (B2, D2), dtype=jnp.float32)
    labels2 = (jnp.arange(B2, dtype=jnp.int32) * 7919) % 13
    loss2 = supcon_loss(features2, labels2)
    jax.block_until_ready(loss2)
    ref2 = supcon_loss_ref(features2, labels2)
    np.testing.assert_allclose(np.asarray(loss2), np.asarray(ref2),
                               rtol=5e-2, atol=5e-2)

    print("KERNEL_OK")
</pallas_src>

<mosaic_0001>
module attributes {stable_mosaic.version = 11 : i64} {
  func.func @_supcon_row_kernel(%arg0: i32, %arg1: memref<16x128xbf16, #tpu.memory_space<vmem>>, %arg2: memref<16x128xbf16, #tpu.memory_space<vmem>>, %arg3: memref<16x1xi32, #tpu.memory_space<vmem>>, %arg4: memref<1x16xi32, #tpu.memory_space<vmem>>, %arg5: memref<16x1xf32, #tpu.memory_space<vmem>>, %arg6: memref<16x1xf32, #tpu.memory_space<vmem>>, %arg7: memref<16x1xf32, #tpu.memory_space<vmem>>, %arg8: memref<16x1xf32, #tpu.memory_space<vmem>>) attributes {dimension_semantics = [#tpu.dimension_semantics<parallel>], iteration_bounds = array<i64: 1>, scalar_prefetch = 0 : i64, scratch_operands = 0 : i64, tpu.core_type = #tpu.core_type<tc>, window_params = [{transform_indices = @transform_0, window_bounds = array<i64: 16, 128>}, {pipeline_mode = #tpu.pipeline_mode<synchronous>, transform_indices = @transform_1, window_bounds = array<i64: 16, 128>}, {transform_indices = @transform_2, window_bounds = array<i64: 16, 1>}, {pipeline_mode = #tpu.pipeline_mode<synchronous>, transform_indices = @transform_3, window_bounds = array<i64: 1, 16>}, {transform_indices = @transform_4, window_bounds = array<i64: 16, 1>}, {transform_indices = @transform_5, window_bounds = array<i64: 16, 1>}, {transform_indices = @transform_6, window_bounds = array<i64: 16, 1>}, {transform_indices = @transform_7, window_bounds = array<i64: 16, 1>}]} {
    %c0 = arith.constant 0 : index
    %c0_0 = arith.constant 0 : index
    %0 = vector.load %arg1[%c0, %c0_0] : memref<16x128xbf16, #tpu.memory_space<vmem>>, vector<16x128xbf16>
    %c0_1 = arith.constant 0 : index
    %c0_2 = arith.constant 0 : index
    %1 = vector.load %arg2[%c0_1, %c0_2] : memref<16x128xbf16, #tpu.memory_space<vmem>>, vector<16x128xbf16>
    %cst = arith.constant dense<0.000000e+00> : vector<16x16xf32>
    %2 = tpu.matmul %0, %1, %cst {dimension_numbers = #tpu.dot_dimension_numbers<[1], [1], [0], [0], [0, 0, 1, 0], [], []>} : vector<16x128xbf16>, vector<16x128xbf16>, vector<16x16xf32> -> vector<16x16xf32>
    %3 = tpu.iota {dimensions = array<i32: 1>} : vector<16x16xi32>
    %c12_i32 = arith.constant 12 : i32
    %4 = vector.broadcast %c12_i32 : i32 to vector<16x16xi32>
    %5 = arith.cmpi slt, %3, %4 : vector<16x16xi32>
    %cst_3 = arith.constant -1.000000e+30 : f32
    %6 = vector.broadcast %cst_3 : f32 to vector<16x16xf32>
    %7 = arith.select %5, %2, %6 : vector<16x16xi1>, vector<16x16xf32>
    %c0_4 = arith.constant 0 : index
    %c0_5 = arith.constant 0 : index
    %8 = vector.load %arg3[%c0_4, %c0_5] : memref<16x1xi32, #tpu.memory_space<vmem>>, vector<16x1xi32>
    %c0_6 = arith.constant 0 : index
    %c0_7 = arith.constant 0 : index
    %9 = vector.load %arg4[%c0_6, %c0_7] : memref<1x16xi32, #tpu.memory_space<vmem>>, vector<1x16xi32>
    %10 = vector.broadcast %8 : vector<16x1xi32> to vector<16x16xi32>
    %11 = vector.broadcast %9 : vector<1x16xi32> to vector<16x16xi32>
    %12 = arith.cmpi eq, %10, %11 : vector<16x16xi32>
    %c0_8 = arith.constant 0 : index
    %c0_9 = arith.constant 0 : index
    %13 = vector.load %arg5[%c0_8, %c0_9] : memref<16x1xf32, #tpu.memory_space<vmem>>, vector<16x1xf32>
    %c0_10 = arith.constant 0 : index
    %c0_11 = arith.constant 0 : index
    %14 = vector.load %arg6[%c0_10, %c0_11] : memref<16x1xf32, #tpu.memory_space<vmem>>, vector<16x1xf32>
    %cst_12 = arith.constant dense<0xFF800000> : vector<16xf32>
    %15 = vector.multi_reduction <maximumf>, %7, %cst_12 [1] : vector<16x16xf32> to vector<16xf32>
    %16 = vector.shape_cast %15 : vector<16xf32> to vector<16x1xf32>
    %17 = vector.broadcast %16 : vector<16x1xf32> to vector<16x16xf32>
    %18 = arith.subf %7, %17 : vector<16x16xf32>
    %19 = math.exp %18 : vector<16x16xf32>
    %20 = arith.subf %14, %16 : vector<16x1xf32>
    %cst_13 = arith.constant dense<0.000000e+00> : vector<16xf32>
    %21 = vector.multi_reduction <add>, %19, %cst_13 [1] : vector<16x16xf32> to vector<16xf32>
    %22 = vector.shape_cast %21 : vector<16xf32> to vector<16x1xf32>
    %23 = math.exp %20 : vector<16x1xf32>
    %24 = arith.subf %22, %23 : vector<16x1xf32>
    %cst_14 = arith.constant 0.000000e+00 : f32
    %25 = vector.broadcast %cst_14 : f32 to vector<16x16xf32>
    %26 = arith.select %12, %7, %25 : vector<16x16xi1>, vector<16x16xf32>
    %cst_15 = arith.constant dense<0.000000e+00> : vector<16xf32>
    %27 = vector.multi_reduction <add>, %26, %cst_15 [1] : vector<16x16xf32> to vector<16xf32>
    %28 = vector.shape_cast %27 : vector<16xf32> to vector<16x1xf32>
    %29 = arith.subf %28, %14 : vector<16x1xf32>
    %30 = arith.mulf %13, %16 : vector<16x1xf32>
    %31 = arith.subf %29, %30 : vector<16x1xf32>
    %cst_16 = arith.constant 0.000000e+00 : f32
    %32 = vector.broadcast %cst_16 : f32 to vector<16x1xf32>
    %33 = arith.cmpf ogt, %13, %32 : vector<16x1xf32>
    %34 = math.log %24 : vector<16x1xf32>
    %35 = arith.mulf %13, %34 : vector<16x1xf32>
    %36 = arith.subf %31, %35 : vector<16x1xf32>
    %cst_17 = arith.constant 1.000000e+00 : f32
    %37 = vector.broadcast %cst_17 : f32 to vector<16x1xf32>
    %38 = arith.maximumf %13, %37 : vector<16x1xf32>
    %39 = arith.divf %36, %38 : vector<16x1xf32>
    %cst_18 = arith.constant 0.000000e+00 : f32
    %40 = vector.broadcast %cst_18 : f32 to vector<16x1xf32>
    %41 = arith.select %33, %39, %40 : vector<16x1xi1>, vector<16x1xf32>
    %cst_19 = arith.constant 0.000000e+00 : f32
    %42 = vector.broadcast %cst_19 : f32 to vector<16x1xf32>
    %43 = arith.subf %42, %41 : vector<16x1xf32>
    %cst_20 = arith.constant 5.000000e-01 : f32
    %44 = vector.broadcast %cst_20 : f32 to vector<16x1xf32>
    %45 = arith.mulf %43, %44 : vector<16x1xf32>
    %c0_21 = arith.constant 0 : index
    %c0_22 = arith.constant 0 : index
    %46 = vector.load %arg7[%c0_21, %c0_22] : memref<16x1xf32, #tpu.memory_space<vmem>>, vector<16x1xf32>
    tpu.vector_store %arg7[%c0_21, %c0_22], %45 {strides = array<i32>} : memref<16x1xf32, #tpu.memory_space<vmem>>, vector<16x1xf32>,
    %47 = arith.extui %33 : vector<16x1xi1> to vector<16x1xi32>
    %48 = arith.sitofp %47 : vector<16x1xi32> to vector<16x1xf32>
    %c0_23 = arith.constant 0 : index
    %c0_24 = arith.constant 0 : index
    %49 = vector.load %arg8[%c0_23, %c0_24] : memref<16x1xf32, #tpu.memory_space<vmem>>, vector<16x1xf32>
    tpu.vector_store %arg8[%c0_23, %c0_24], %48 {strides = array<i32>} : memref<16x1xf32, #tpu.memory_space<vmem>>, vector<16x1xf32>,
    return
  }
  func.func @transform_0(%arg0: i32) -> (i32, i32) {
    %c0_i32 = arith.constant 0 : i32
    %c0_i32_0 = arith.constant 0 : i32
    return %arg0, %c0_i32 : i32, i32
  }
  func.func @transform_1(%arg0: i32) -> (i32, i32) {
    %c0_i32 = arith.constant 0 : i32
    %c0_i32_0 = arith.constant 0 : i32
    %c0_i32_1 = arith.constant 0 : i32
    return %c0_i32, %c0_i32_0 : i32, i32
  }
  func.func @transform_2(%arg0: i32) -> (i32, i32) {
    %c0_i32 = arith.constant 0 : i32
    %c0_i32_0 = arith.constant 0 : i32
    return %arg0, %c0_i32 : i32, i32
  }
  func.func @transform_3(%arg0: i32) -> (i32, i32) {
    %c0_i32 = arith.constant 0 : i32
    %c0_i32_0 = arith.constant 0 : i32
    %c0_i32_1 = arith.constant 0 : i32
    return %c0_i32, %c0_i32_0 : i32, i32
  }
  func.func @transform_4(%arg0: i32) -> (i32, i32) {
    %c0_i32 = arith.constant 0 : i32
    %c0_i32_0 = arith.constant 0 : i32
    return %arg0, %c0_i32 : i32, i32
  }
  func.func @transform_5(%arg0: i32) -> (i32, i32) {
    %c0_i32 = arith.constant 0 : i32
    %c0_i32_0 = arith.constant 0 : i32
    return %arg0, %c0_i32 : i32, i32
  }
  func.func @transform_6(%arg0: i32) -> (i32, i32) {
    %c0_i32 = arith.constant 0 : i32
    %c0_i32_0 = arith.constant 0 : i32
    return %arg0, %c0_i32 : i32, i32
  }
  func.func @transform_7(%arg0: i32) -> (i32, i32) {
    %c0_i32 = arith.constant 0 : i32
    %c0_i32_0 = arith.constant 0 : i32
    return %arg0, %c0_i32 : i32, i32
  }
}

module attributes {stable_mosaic.version = 11 : i64} {
  func.func @_supcon_row_kernel(%arg0: i32, %arg1: memref<16x128xbf16, #tpu.memory_space<vmem>>, %arg2: memref<16x128xbf16, #tpu.memory_space<vmem>>, %arg3: memref<16x1xi32, #tpu.memory_space<vmem>>, %arg4: memref<1x16xi32, #tpu.memory_space<vmem>>, %arg5: memref<16x1xf32, #tpu.memory_space<vmem>>, %arg6: memref<16x1xf32, #tpu.memory_space<vmem>>, %arg7: memref<16x1xf32, #tpu.memory_space<vmem>>, %arg8: memref<16x1xf32, #tpu.memory_space<vmem>>) attributes {dimension_semantics = [#tpu.dimension_semantics<parallel>], iteration_bounds = array<i64: 1>, scalar_prefetch = 0 : i64, scratch_operands = 0 : i64, tpu.core_type = #tpu.core_type<tc>, window_params = [{transform_indices = @transform_0, window_bounds = array<i64: 16, 128>}, {pipeline_mode = #tpu.pipeline_mode<synchronous>, transform_indices = @transform_1, window_bounds = array<i64: 16, 128>}, {transform_indices = @transform_2, window_bounds = array<i64: 16, 1>}, {pipeline_mode = #tpu.pipeline_mode<synchronous>, transform_indices = @transform_3, window_bounds = array<i64: 1, 16>}, {transform_indices = @transform_4, window_bounds = array<i64: 16, 1>}, {transform_indices = @transform_5, window_bounds = array<i64: 16, 1>}, {transform_indices = @transform_6, window_bounds = array<i64: 16, 1>}, {transform_indices = @transform_7, window_bounds = array<i64: 16, 1>}]} {
    %c0 = arith.constant 0 : index
    %c0_0 = arith.constant 0 : index
    %0 = vector.load %arg1[%c0, %c0_0] : memref<16x128xbf16, #tpu.memory_space<vmem>>, vector<16x128xbf16>
    %c0_1 = arith.constant 0 : index
    %c0_2 = arith.constant 0 : index
    %1 = vector.load %arg2[%c0_1, %c0_2] : memref<16x128xbf16, #tpu.memory_space<vmem>>, vector<16x128xbf16>
    %cst = arith.constant dense<0.000000e+00> : vector<16x16xf32>
    %2 = tpu.matmul %0, %1, %cst {dimension_numbers = #tpu.dot_dimension_numbers<[1], [1], [0], [0], [0, 0, 1, 0], [], []>} : vector<16x128xbf16>, vector<16x128xbf16>, vector<16x16xf32> -> vector<16x16xf32>
    %3 = tpu.iota {dimensions = array<i32: 1>} : vector<16x16xi32>
    %c12_i32 = arith.constant 12 : i32
    %4 = vector.broadcast %c12_i32 : i32 to vector<16x16xi32>
    %5 = arith.cmpi slt, %3, %4 : vector<16x16xi32>
    %cst_3 = arith.constant -1.000000e+30 : f32
    %6 = vector.broadcast %cst_3 : f32 to vector<16x16xf32>
    %7 = arith.select %5, %2, %6 : vector<16x16xi1>, vector<16x16xf32>
    %c0_4 = arith.constant 0 : index
    %c0_5 = arith.constant 0 : index
    %8 = vector.load %arg3[%c0_4, %c0_5] : memref<16x1xi32, #tpu.memory_space<vmem>>, vector<16x1xi32>
    %c0_6 = arith.constant 0 : index
    %c0_7 = arith.constant 0 : index
    %9 = vector.load %arg4[%c0_6, %c0_7] : memref<1x16xi32, #tpu.memory_space<vmem>>, vector<1x16xi32>
    %10 = vector.broadcast %8 : vector<16x1xi32> to vector<16x16xi32>
    %11 = vector.broadcast %9 : vector<1x16xi32> to vector<16x16xi32>
    %12 = arith.cmpi eq, %10, %11 : vector<16x16xi32>
    %c0_8 = arith.constant 0 : index
    %c0_9 = arith.constant 0 : index
    %13 = vector.load %arg5[%c0_8, %c0_9] : memref<16x1xf32, #tpu.memory_space<vmem>>, vector<16x1xf32>
    %c0_10 = arith.constant 0 : index
    %c0_11 = arith.constant 0 : index
    %14 = vector.load %arg6[%c0_10, %c0_11] : memref<16x1xf32, #tpu.memory_space<vmem>>, vector<16x1xf32>
    %cst_12 = arith.constant dense<0xFF800000> : vector<16xf32>
    %15 = vector.multi_reduction <maximumf>, %7, %cst_12 [1] : vector<16x16xf32> to vector<16xf32>
    %16 = vector.shape_cast %15 : vector<16xf32> to vector<16x1xf32>
    %17 = vector.broadcast %16 : vector<16x1xf32> to vector<16x16xf32>
    %18 = arith.subf %7, %17 : vector<16x16xf32>
    %19 = math.exp %18 : vector<16x16xf32>
    %20 = arith.subf %14, %16 : vector<16x1xf32>
    %cst_13 = arith.constant dense<0.000000e+00> : vector<16xf32>
    %21 = vector.multi_reduction <add>, %19, %cst_13 [1] : vector<16x16xf32> to vector<16xf32>
    %22 = vector.shape_cast %21 : vector<16xf32> to vector<16x1xf32>
    %23 = math.exp %20 : vector<16x1xf32>
    %24 = arith.subf %22, %23 : vector<16x1xf32>
    %cst_14 = arith.constant 0.000000e+00 : f32
    %25 = vector.broadcast %cst_14 : f32 to vector<16x16xf32>
    %26 = arith.select %12, %7, %25 : vector<16x16xi1>, vector<16x16xf32>
    %cst_15 = arith.constant dense<0.000000e+00> : vector<16xf32>
    %27 = vector.multi_reduction <add>, %26, %cst_15 [1] : vector<16x16xf32> to vector<16xf32>
    %28 = vector.shape_cast %27 : vector<16xf32> to vector<16x1xf32>
    %29 = arith.subf %28, %14 : vector<16x1xf32>
    %30 = arith.mulf %13, %16 : vector<16x1xf32>
    %31 = arith.subf %29, %30 : vector<16x1xf32>
    %cst_16 = arith.constant 0.000000e+00 : f32
    %32 = vector.broadcast %cst_16 : f32 to vector<16x1xf32>
    %33 = arith.cmpf ogt, %13, %32 : vector<16x1xf32>
    %34 = math.log %24 : vector<16x1xf32>
    %35 = arith.mulf %13, %34 : vector<16x1xf32>
    %36 = arith.subf %31, %35 : vector<16x1xf32>
    %cst_17 = arith.constant 1.000000e+00 : f32
    %37 = vector.broadcast %cst_17 : f32 to vector<16x1xf32>
    %38 = arith.maximumf %13, %37 : vector<16x1xf32>
    %39 = arith.divf %36, %38 : vector<16x1xf32>
    %cst_18 = arith.constant 0.000000e+00 : f32
    %40 = vector.broadcast %cst_18 : f32 to vector<16x1xf32>
    %41 = arith.select %33, %39, %40 : vector<16x1xi1>, vector<16x1xf32>
    %cst_19 = arith.constant 0.000000e+00 : f32
    %42 = vector.broadcast %cst_19 : f32 to vector<16x1xf32>
    %43 = arith.subf %42, %41 : vector<16x1xf32>
    %cst_20 = arith.constant 5.000000e-01 : f32
    %44 = vector.broadcast %cst_20 : f32 to vector<16x1xf32>
    %45 = arith.mulf %43, %44 : vector<16x1xf32>
    %c0_21 = arith.constant 0 : index
    %c0_22 = arith.constant 0 : index
    %46 = vector.load %arg7[%c0_21, %c0_22] : memref<16x1xf32, #tpu.memory_space<vmem>>, vector<16x1xf32>
    tpu.vector_store %arg7[%c0_21, %c0_22], %45 {strides = array<i32>} : memref<16x1xf32, #tpu.memory_space<vmem>>, vector<16x1xf32>,
    %47 = arith.extui %33 : vector<16x1xi1> to vector<16x1xi32>
    %48 = arith.sitofp %47 : vector<16x1xi32> to vector<16x1xf32>
    %c0_23 = arith.constant 0 : index
    %c0_24 = arith.constant 0 : index
    %49 = vector.load %arg8[%c0_23, %c0_24] : memref<16x1xf32, #tpu.memory_space<vmem>>, vector<16x1xf32>
    tpu.vector_store %arg8[%c0_23, %c0_24], %48 {strides = array<i32>} : memref<16x1xf32, #tpu.memory_space<vmem>>, vector<16x1xf32>,
    return
  }
  func.func @transform_0(%arg0: i32) -> (i32, i32) {
    %c0_i32 = arith.constant 0 : i32
    %c0_i32_0 = arith.constant 0 : i32
    return %arg0, %c0_i32 : i32, i32
  }
  func.func @transform_1(%arg0: i32) -> (i32, i32) {
    %c0_i32 = arith.constant 0 : i32
    %c0_i32_0 = arith.constant 0 : i32
    %c0_i32_1 = arith.constant 0 : i32
    return %c0_i32, %c0_i32_0 : i32, i32
  }
  func.func @transform_2(%arg0: i32) -> (i32, i32) {
    %c0_i32 = arith.constant 0 : i32
    %c0_i32_0 = arith.constant 0 : i32
    return %arg0, %c0_i32 : i32, i32
  }
  func.func @transform_3(%arg0: i32) -> (i32, i32) {
    %c0_i32 = arith.constant 0 : i32
    %c0_i32_0 = arith.constant 0 : i32
    %c0_i32_1 = arith.constant 0 : i32
    return %c0_i32, %c0_i32_0 : i32, i32
  }
  func.func @transform_4(%arg0: i32) -> (i32, i32) {
    %c0_i32 = arith.constant 0 : i32
    %c0_i32_0 = arith.constant 0 : i32
    return %arg0, %c0_i32 : i32, i32
  }
  func.func @transform_5(%arg0: i32) -> (i32, i32) {
    %c0_i32 = arith.constant 0 : i32
    %c0_i32_0 = arith.constant 0 : i32
    return %arg0, %c0_i32 : i32, i32
  }
  func.func @transform_6(%arg0: i32) -> (i32, i32) {
    %c0_i32 = arith.constant 0 : i32
    %c0_i32_0 = arith.constant 0 : i32
    return %arg0, %c0_i32 : i32, i32
  }
  func.func @transform_7(%arg0: i32) -> (i32, i32) {
    %c0_i32 = arith.constant 0 : i32
    %c0_i32_0 = arith.constant 0 : i32
    return %arg0, %c0_i32 : i32, i32
  }
}

</mosaic_0001>

<llo_original>
// kernel: tpu_custom_call.1
$region0: #{tpu_custom_call.1}
  #allocation0 [shape = 'u32[]', space=smem, size = 0x4, offset = 0x4, fixed_abs, tag = 'smem constant byte address 0x4 - core index']
  #allocation1 [shape = 'u32[144,128]{1,0:T(1,128)}', space=vmem, size = 0x12000, scoped, tag = 'internal scratch']
  %s0 = inlined_call_operand.vmem [shape: bf16[16,128], index: 0, kind: input, shape index: {}]
  %s1 = inlined_call_operand.vmem [shape: bf16[16,128], index: 1, kind: input, shape index: {}]
  %s2 = inlined_call_operand.vmem [shape: s32[16,1], index: 2, kind: input, shape index: {}]
  %s3 = inlined_call_operand.vmem [shape: s32[1,16], index: 3, kind: input, shape index: {}]
  %s4 = inlined_call_operand.vmem [shape: f32[16,1], index: 4, kind: input, shape index: {}]
  %s5 = inlined_call_operand.vmem [shape: f32[16,1], index: 5, kind: input, shape index: {}]
  %s6 = inlined_call_operand.vmem [shape: f32[16,1], index: 6, kind: output, shape index: {0}]
  %s7 = inlined_call_operand.vmem [shape: f32[16,1], index: 7, kind: output, shape index: {1}]
  %8 = xla_tuple %s6, %s7
  %s9 = sld [smem:[#allocation0]]
  $region42: #{tpu_custom_call.1} parent=0
    _
  %s11 = ssub.s32 1, %s9
  %s12 = scalar_select 0, %s11, %s9
  // Predicated region
  $region2: #{tpu_custom_call.1} parent=0 // pred_check
    _
  $region3: #{tpu_custom_call.1} parent=0 // pred_check_branch
    %14 = sbr.rel (0) target = $region5
  $region4: #{tpu_custom_call.1} parent=0 // pred_region
    _
  $region5: #{tpu_custom_call.1} parent=0 // pred_fallthru
    _
  // Predicated region
  $region6: #{tpu_custom_call.1} parent=0 // pred_check
    _
  $region7: #{tpu_custom_call.1} parent=0 // pred_check_branch
    %16 = sbr.rel (0) target = $region9
  $region8: #{tpu_custom_call.1} parent=0 // pred_region
    _
  $region9: #{tpu_custom_call.1} parent=0 // pred_fallthru
    _
  // Predicated region
  $region10: #{tpu_custom_call.1} parent=0 // pred_check
    _
  $region11: #{tpu_custom_call.1} parent=0 // pred_check_branch
    %18 = sbr.rel (0) target = $region13
  $region12: #{tpu_custom_call.1} parent=0 // pred_region
    _
  $region13: #{tpu_custom_call.1} parent=0 // pred_fallthru
    _
  // Predicated region
  $region14: #{tpu_custom_call.1} parent=0 // pred_check
    _
  $region15: #{tpu_custom_call.1} parent=0 // pred_check_branch
    %20 = sbr.rel (0) target = $region17
  $region16: #{tpu_custom_call.1} parent=0 // pred_region
    _
  $region17: #{tpu_custom_call.1} parent=0 // pred_fallthru
    _
  // Predicated region
  $region18: #{tpu_custom_call.1} parent=0 // pred_check
    _
  $region19: #{tpu_custom_call.1} parent=0 // pred_check_branch
    %22 = sbr.rel (0) target = $region21
  $region20: #{tpu_custom_call.1} parent=0 // pred_region
    _
  $region21: #{tpu_custom_call.1} parent=0 // pred_fallthru
    _
  // Predicated region
  $region22: #{tpu_custom_call.1} parent=0 // pred_check
    _
  $region23: #{tpu_custom_call.1} parent=0 // pred_check_branch
    %24 = sbr.rel (0) target = $region25
  $region24: #{tpu_custom_call.1} parent=0 // pred_region
    _
  $region25: #{tpu_custom_call.1} parent=0 // pred_fallthru
    _
  %v26 = vld [vmem:[%s0] sm:$0xf]
  %v27 = vld [vmem:[%s0 + $0x4] sm:$0xf]
  %v28 = vld [vmem:[%s1] sm:$0xf]
  %v29 = vld [vmem:[%s1 + $0x4] sm:$0xf]
  %v32 = vunpack.c.l.b16 %v26
  %v33 = vunpack.c.l.b16 %v27
  %v34 = vpack.c.b16 %v33, %v32
  %v38 = vunpack.c.l.b16 %v28
  %v39 = vunpack.c.l.b16 %v29
  %v40 = vpack.c.b16 %v39, %v38
  %42 = vmatprep.subr.bf16.mxu0 0
  %43 = vmatpush1.bf16.xpose.msra.mxu0 0
  %44 = vmatprep.subr.bf16.mxu0 0
  %45 = vmatpush1.bf16.xpose.msra.mxu0 0
  %46 = vmatprep.subr.bf16.mxu0 0
  %47 = vmatpush1.bf16.xpose.msra.mxu0 0
  %48 = vmatprep.subr.bf16.mxu0 0
  %49 = vmatpush1.bf16.xpose.msra.mxu0 0
  %50 = vmatprep.subr.bf16.mxu0 0
  %51 = vmatpush1.bf16.xpose.msra.mxu0 0
  %52 = vmatprep.subr.bf16.mxu0 0
  %53 = vmatpush1.bf16.xpose.msra.mxu0 0
  %54 = vmatprep.subr.bf16.mxu0 0
  %55 = vmatpush1.bf16.xpose.msra.mxu0 0
  %56 = vmatprep.subr.bf16.mxu0 0
  %57 = vmatpush1.bf16.xpose.msra.mxu0 %v40
  %58 = vmatprep.subr.bf16.mxu0 0
  %59 = vmatpush2.bf16.xpose.msra.mxu0 0
  %60 = vmatprep.subr.bf16.mxu0 0
  %61 = vmatpush2.bf16.xpose.msra.mxu0 0
  %62 = vmatprep.subr.bf16.mxu0 0
  %63 = vmatpush2.bf16.xpose.msra.mxu0 0
  %64 = vmatprep.subr.bf16.mxu0 0
  %65 = vmatpush2.bf16.xpose.msra.mxu0 0
  %66 = vmatprep.subr.bf16.mxu0 0
  %67 = vmatpush2.bf16.xpose.msra.mxu0 0
  %68 = vmatprep.subr.bf16.mxu0 0
  %69 = vmatpush2.bf16.xpose.msra.mxu0 0
  %70 = vmatprep.subr.bf16.mxu0 0
  %71 = vmatpush2.bf16.xpose.msra.mxu0 0
  %72 = vmatprep.subr.bf16.mxu0 0
  %73 = vmatpush2.bf16.xpose.msra.mxu0 0
  %74 = vmatprep.mubr.bf16.mxu0 0
  %75 = vmatmul.mubr.bf16.gmra.mxu0 %v34
  %v76 = vpop.f32.mrf.mxu0
  %v77 = vadd.f32 0.0, %v76
  %v78 = vpop.f32.mrf.mxu0
  %v79 = vpop.f32.mrf.mxu0
  %v80 = vadd.f32 0.0, %v79
  %v81 = vpop.f32.mrf.mxu0
  %82 = vdwg.mxu0
  %v83 = vlaneseq
  %v84 = vand.u32 %v83, 127
  %vm85 = vcmp.lt.s32.totalorder %v84, 12
  %v86 = vsel %vm85, %v77, -1e+30
  %v87 = vsel %vm85, %v80, -1e+30
  %v88 = vld [vmem:[%s2] sm:$0xff]
  %v89 = vld [vmem:[%s2 + $0x8] sm:$0xff]
  %v90 = vld [vmem:[%s3] sm:$0x1]
  %91 = vset.pattern.permute.xlu0 0
  %92 = vperm.xlu0 %91, %v88
  %v93 = vpop.permute.xlu0 %92
  %94 = vset.pattern.permute.xlu0 0
  %95 = vperm.xlu0 %94, %v89
  %v96 = vpop.permute.xlu0 %95
  %v97 = vlaneseq
  %v98 = vshrl.u32 %v97, 7
  %v99 = vsub.s32 0, %v98
  %v100 = vrot.slane %v90, %v99
  %vm101 = vcmp.eq.s32.totalorder %v93, %v100
  %vm102 = vcmp.eq.s32.totalorder %v96, %v100
  %v103 = vld [vmem:[%s4] sm:$0xff]
  %v104 = vld [vmem:[%s4 + $0x8] sm:$0xff]
  %v105 = vld [vmem:[%s5] sm:$0xff]
  %v106 = vld [vmem:[%s5 + $0x8] sm:$0xff]
  %vm107 = vcmask 130048
  %v108 = vsel %vm107, %v86, -inf
  %109 = vmax.xlane.f32.xlu0 %v108
  %v110 = vpop.xlane.xlu0 %109
  %v111 = vsel %vm107, %v87, -inf
  %112 = vmax.xlane.f32.xlu0 %v111
  %v113 = vpop.xlane.xlu0 %112
  %v114 = vsub.f32 %v86, %v110
  %v115 = vsub.f32 %v87, %v113
  %v116 = vmul.f32 %v114, 1.442695
  %v117 = vpow.pop %v116
  %v118 = vmul.f32 %v115, 1.442695
  %v119 = vpow.pop %v118
  %v120 = vsub.f32 %v105, %v110
  %v121 = vsub.f32 %v106, %v113
  %v122 = vsel %vm107, %v117, 0.0
  %123 = vadd.xlane.f32.xlu0 %v122
  %v124 = vpop.xlane.xlu0 %123
  %v125 = vsel %vm107, %v119, 0.0
  %126 = vadd.xlane.f32.xlu0 %v125
  %v127 = vpop.xlane.xlu0 %126
  %v128 = vmul.f32 %v120, 1.442695
  %v129 = vpow.pop %v128
  %v130 = vmul.f32 %v121, 1.442695
  %v131 = vpow.pop %v130
  %v132 = vsub.f32 %v124, %v129
  %v133 = vsub.f32 %v127, %v131
  %v134 = vsel %vm101, %v86, 0.0
  %v135 = vsel %vm102, %v87, 0.0
  %v136 = vsel %vm107, %v134, 0.0
  %137 = vadd.xlane.f32.xlu0 %v136
  %v138 = vpop.xlane.xlu0 %137
  %v139 = vsel %vm107, %v135, 0.0
  %140 = vadd.xlane.f32.xlu0 %v139
  %v141 = vpop.xlane.xlu0 %140
  %v142 = vsub.f32 %v138, %v105
  %v143 = vsub.f32 %v141, %v106
  %v144 = vmul.f32 %v103, %v110
  %v145 = vmul.f32 %v104, %v113
  %v146 = vsub.f32 %v142, %v144
  %v147 = vsub.f32 %v143, %v145
  %vm148 = vcmp.gt.f32.partialorder %v103, 0.0
  %vm149 = vcmp.gt.f32.partialorder %v104, 0.0
  %v150 = vlog2.pop %v132
  %v151 = vmul.f32 %v150, 0.6931472
  %v152 = vlog2.pop %v133
  %v153 = vmul.f32 %v152, 0.6931472
  %v154 = vmul.f32 %v103, %v151
  %v155 = vmul.f32 %v104, %v153
  %v156 = vsub.f32 %v146, %v154
  %v157 = vsub.f32 %v147, %v155
  %v158 = vmax.f32 %v103, 1.0
  %v159 = vmax.f32 %v104, 1.0
  %v160 = vrcp.pop %v158
  %v161 = vmul.f32 %v156, %v160
  %v162 = vrcp.pop %v159
  %v163 = vmul.f32 %v157, %v162
  %v164 = vsel %vm148, %v161, 0.0
  %v165 = vsel %vm149, %v163, 0.0
  %v166 = vsub.f32 0.0, %v164
  %v167 = vsub.f32 0.0, %v165
  %v168 = vmul.f32 %v166, 0.5
  %v169 = vmul.f32 %v167, 0.5
  %vm170 = vcmask 7168
  %171 = vst.msk [vmem:[%s6] sm:$0xff] %vm170, %v168
  %172 = vst.msk [vmem:[%s6 + $0x8] sm:$0xff] %vm170, %v169
  %v173 = vsel %vm148, 1, 0
  %v174 = vsel %vm149, 1, 0
  %v175 = vcvt.s32.f32 %v173
  %v176 = vcvt.s32.f32 %v174
  %177 = vst.msk [vmem:[%s7] sm:$0xff] %vm170, %v175
  %178 = vst.msk [vmem:[%s7 + $0x8] sm:$0xff] %vm170, %v176
  // Predicated region
  $region26: #{tpu_custom_call.1} parent=0 // pred_check
    _
  $region27: #{tpu_custom_call.1} parent=0 // pred_check_branch
    %180 = sbr.rel (0) target = $region29
  $region28: #{tpu_custom_call.1} parent=0 // pred_region
    _
  $region29: #{tpu_custom_call.1} parent=0 // pred_fallthru
    _
  // Predicated region
  $region30: #{tpu_custom_call.1} parent=0 // pred_check
    _
  $region31: #{tpu_custom_call.1} parent=0 // pred_check_branch
    %182 = sbr.rel (0) target = $region33
  $region32: #{tpu_custom_call.1} parent=0 // pred_region
    _
  $region33: #{tpu_custom_call.1} parent=0 // pred_fallthru
    _
  // Predicated region
  $region34: #{tpu_custom_call.1} parent=0 // pred_check
    _
  $region35: #{tpu_custom_call.1} parent=0 // pred_check_branch
    %184 = sbr.rel (0) target = $region37
  $region36: #{tpu_custom_call.1} parent=0 // pred_region
    _
  $region37: #{tpu_custom_call.1} parent=0 // pred_fallthru
    _
  // Predicated region
  $region38: #{tpu_custom_call.1} parent=0 // pred_check
    _
  $region39: #{tpu_custom_call.1} parent=0 // pred_check_branch
    %186 = sbr.rel (0) target = $region41
  $region40: #{tpu_custom_call.1} parent=0 // pred_region
    _
  $region41: #{tpu_custom_call.1} parent=0 // pred_fallthru
    _

// kernel: tpu_custom_call.1
$region0: #{tpu_custom_call.1}
  #allocation0 [shape = 'u32[]', space=smem, size = 0x4, offset = 0x4, fixed_abs, tag = 'smem constant byte address 0x4 - core index']
  #allocation1 [shape = 'u32[144,128]{1,0:T(1,128)}', space=vmem, size = 0x12000, scoped, tag = 'internal scratch']
  %s0 = inlined_call_operand.vmem [shape: bf16[16,128], index: 0, kind: input, shape index: {}]
  %s1 = inlined_call_operand.vmem [shape: bf16[16,128], index: 1, kind: input, shape index: {}]
  %s2 = inlined_call_operand.vmem [shape: s32[16,1], index: 2, kind: input, shape index: {}]
  %s3 = inlined_call_operand.vmem [shape: s32[1,16], index: 3, kind: input, shape index: {}]
  %s4 = inlined_call_operand.vmem [shape: f32[16,1], index: 4, kind: input, shape index: {}]
  %s5 = inlined_call_operand.vmem [shape: f32[16,1], index: 5, kind: input, shape index: {}]
  %s6 = inlined_call_operand.vmem [shape: f32[16,1], index: 6, kind: output, shape index: {0}]
  %s7 = inlined_call_operand.vmem [shape: f32[16,1], index: 7, kind: output, shape index: {1}]
  %8 = xla_tuple %s6, %s7
  %s9 = sld [smem:[#allocation0]]
  $region42: #{tpu_custom_call.1} parent=0
    _
  %s11 = ssub.s32 1, %s9
  %s12 = scalar_select 0, %s11, %s9
  // Predicated region
  $region2: #{tpu_custom_call.1} parent=0 // pred_check
    _
  $region3: #{tpu_custom_call.1} parent=0 // pred_check_branch
    %14 = sbr.rel (0) target = $region5
  $region4: #{tpu_custom_call.1} parent=0 // pred_region
    _
  $region5: #{tpu_custom_call.1} parent=0 // pred_fallthru
    _
  // Predicated region
  $region6: #{tpu_custom_call.1} parent=0 // pred_check
    _
  $region7: #{tpu_custom_call.1} parent=0 // pred_check_branch
    %16 = sbr.rel (0) target = $region9
  $region8: #{tpu_custom_call.1} parent=0 // pred_region
    _
  $region9: #{tpu_custom_call.1} parent=0 // pred_fallthru
    _
  // Predicated region
  $region10: #{tpu_custom_call.1} parent=0 // pred_check
    _
  $region11: #{tpu_custom_call.1} parent=0 // pred_check_branch
    %18 = sbr.rel (0) target = $region13
  $region12: #{tpu_custom_call.1} parent=0 // pred_region
    _
  $region13: #{tpu_custom_call.1} parent=0 // pred_fallthru
    _
  // Predicated region
  $region14: #{tpu_custom_call.1} parent=0 // pred_check
    _
  $region15: #{tpu_custom_call.1} parent=0 // pred_check_branch
    %20 = sbr.rel (0) target = $region17
  $region16: #{tpu_custom_call.1} parent=0 // pred_region
    _
  $region17: #{tpu_custom_call.1} parent=0 // pred_fallthru
    _
  // Predicated region
  $region18: #{tpu_custom_call.1} parent=0 // pred_check
    _
  $region19: #{tpu_custom_call.1} parent=0 // pred_check_branch
    %22 = sbr.rel (0) target = $region21
  $region20: #{tpu_custom_call.1} parent=0 // pred_region
    _
  $region21: #{tpu_custom_call.1} parent=0 // pred_fallthru
    _
  // Predicated region
  $region22: #{tpu_custom_call.1} parent=0 // pred_check
    _
  $region23: #{tpu_custom_call.1} parent=0 // pred_check_branch
    %24 = sbr.rel (0) target = $region25
  $region24: #{tpu_custom_call.1} parent=0 // pred_region
    _
  $region25: #{tpu_custom_call.1} parent=0 // pred_fallthru
    _
  %v26 = vld [vmem:[%s0] sm:$0xf]
  %v27 = vld [vmem:[%s0 + $0x4] sm:$0xf]
  %v28 = vld [vmem:[%s1] sm:$0xf]
  %v29 = vld [vmem:[%s1 + $0x4] sm:$0xf]
  %v32 = vunpack.c.l.b16 %v26
  %v33 = vunpack.c.l.b16 %v27
  %v34 = vpack.c.b16 %v33, %v32
  %v38 = vunpack.c.l.b16 %v28
  %v39 = vunpack.c.l.b16 %v29
  %v40 = vpack.c.b16 %v39, %v38
  %42 = vmatprep.subr.bf16.mxu0 0
  %43 = vmatpush1.bf16.xpose.msra.mxu0 0
  %44 = vmatprep.subr.bf16.mxu0 0
  %45 = vmatpush1.bf16.xpose.msra.mxu0 0
  %46 = vmatprep.subr.bf16.mxu0 0
  %47 = vmatpush1.bf16.xpose.msra.mxu0 0
  %48 = vmatprep.subr.bf16.mxu0 0
  %49 = vmatpush1.bf16.xpose.msra.mxu0 0
  %50 = vmatprep.subr.bf16.mxu0 0
  %51 = vmatpush1.bf16.xpose.msra.mxu0 0
  %52 = vmatprep.subr.bf16.mxu0 0
  %53 = vmatpush1.bf16.xpose.msra.mxu0 0
  %54 = vmatprep.subr.bf16.mxu0 0
  %55 = vmatpush1.bf16.xpose.msra.mxu0 0
  %56 = vmatprep.subr.bf16.mxu0 0
  %57 = vmatpush1.bf16.xpose.msra.mxu0 %v40
  %58 = vmatprep.subr.bf16.mxu0 0
  %59 = vmatpush2.bf16.xpose.msra.mxu0 0
  %60 = vmatprep.subr.bf16.mxu0 0
  %61 = vmatpush2.bf16.xpose.msra.mxu0 0
  %62 = vmatprep.subr.bf16.mxu0 0
  %63 = vmatpush2.bf16.xpose.msra.mxu0 0
  %64 = vmatprep.subr.bf16.mxu0 0
  %65 = vmatpush2.bf16.xpose.msra.mxu0 0
  %66 = vmatprep.subr.bf16.mxu0 0
  %67 = vmatpush2.bf16.xpose.msra.mxu0 0
  %68 = vmatprep.subr.bf16.mxu0 0
  %69 = vmatpush2.bf16.xpose.msra.mxu0 0
  %70 = vmatprep.subr.bf16.mxu0 0
  %71 = vmatpush2.bf16.xpose.msra.mxu0 0
  %72 = vmatprep.subr.bf16.mxu0 0
  %73 = vmatpush2.bf16.xpose.msra.mxu0 0
  %74 = vmatprep.mubr.bf16.mxu0 0
  %75 = vmatmul.mubr.bf16.gmra.mxu0 %v34
  %v76 = vpop.f32.mrf.mxu0
  %v77 = vadd.f32 0.0, %v76
  %v78 = vpop.f32.mrf.mxu0
  %v79 = vpop.f32.mrf.mxu0
  %v80 = vadd.f32 0.0, %v79
  %v81 = vpop.f32.mrf.mxu0
  %82 = vdwg.mxu0
  %v83 = vlaneseq
  %v84 = vand.u32 %v83, 127
  %vm85 = vcmp.lt.s32.totalorder %v84, 12
  %v86 = vsel %vm85, %v77, -1e+30
  %v87 = vsel %vm85, %v80, -1e+30
  %v88 = vld [vmem:[%s2] sm:$0xff]
  %v89 = vld [vmem:[%s2 + $0x8] sm:$0xff]
  %v90 = vld [vmem:[%s3] sm:$0x1]
  %91 = vset.pattern.permute.xlu0 0
  %92 = vperm.xlu0 %91, %v88
  %v93 = vpop.permute.xlu0 %92
  %94 = vset.pattern.permute.xlu0 0
  %95 = vperm.xlu0 %94, %v89
  %v96 = vpop.permute.xlu0 %95
  %v97 = vlaneseq
  %v98 = vshrl.u32 %v97, 7
  %v99 = vsub.s32 0, %v98
  %v100 = vrot.slane %v90, %v99
  %vm101 = vcmp.eq.s32.totalorder %v93, %v100
  %vm102 = vcmp.eq.s32.totalorder %v96, %v100
  %v103 = vld [vmem:[%s4] sm:$0xff]
  %v104 = vld [vmem:[%s4 + $0x8] sm:$0xff]
  %v105 = vld [vmem:[%s5] sm:$0xff]
  %v106 = vld [vmem:[%s5 + $0x8] sm:$0xff]
  %vm107 = vcmask 130048
  %v108 = vsel %vm107, %v86, -inf
  %109 = vmax.xlane.f32.xlu0 %v108
  %v110 = vpop.xlane.xlu0 %109
  %v111 = vsel %vm107, %v87, -inf
  %112 = vmax.xlane.f32.xlu0 %v111
  %v113 = vpop.xlane.xlu0 %112
  %v114 = vsub.f32 %v86, %v110
  %v115 = vsub.f32 %v87, %v113
  %v116 = vmul.f32 %v114, 1.442695
  %v117 = vpow.pop %v116
  %v118 = vmul.f32 %v115, 1.442695
  %v119 = vpow.pop %v118
  %v120 = vsub.f32 %v105, %v110
  %v121 = vsub.f32 %v106, %v113
  %v122 = vsel %vm107, %v117, 0.0
  %123 = vadd.xlane.f32.xlu0 %v122
  %v124 = vpop.xlane.xlu0 %123
  %v125 = vsel %vm107, %v119, 0.0
  %126 = vadd.xlane.f32.xlu0 %v125
  %v127 = vpop.xlane.xlu0 %126
  %v128 = vmul.f32 %v120, 1.442695
  %v129 = vpow.pop %v128
  %v130 = vmul.f32 %v121, 1.442695
  %v131 = vpow.pop %v130
  %v132 = vsub.f32 %v124, %v129
  %v133 = vsub.f32 %v127, %v131
  %v134 = vsel %vm101, %v86, 0.0
  %v135 = vsel %vm102, %v87, 0.0
  %v136 = vsel %vm107, %v134, 0.0
  %137 = vadd.xlane.f32.xlu0 %v136
  %v138 = vpop.xlane.xlu0 %137
  %v139 = vsel %vm107, %v135, 0.0
  %140 = vadd.xlane.f32.xlu0 %v139
  %v141 = vpop.xlane.xlu0 %140
  %v142 = vsub.f32 %v138, %v105
  %v143 = vsub.f32 %v141, %v106
  %v144 = vmul.f32 %v103, %v110
  %v145 = vmul.f32 %v104, %v113
  %v146 = vsub.f32 %v142, %v144
  %v147 = vsub.f32 %v143, %v145
  %vm148 = vcmp.gt.f32.partialorder %v103, 0.0
  %vm149 = vcmp.gt.f32.partialorder %v104, 0.0
  %v150 = vlog2.pop %v132
  %v151 = vmul.f32 %v150, 0.6931472
  %v152 = vlog2.pop %v133
  %v153 = vmul.f32 %v152, 0.6931472
  %v154 = vmul.f32 %v103, %v151
  %v155 = vmul.f32 %v104, %v153
  %v156 = vsub.f32 %v146, %v154
  %v157 = vsub.f32 %v147, %v155
  %v158 = vmax.f32 %v103, 1.0
  %v159 = vmax.f32 %v104, 1.0
  %v160 = vrcp.pop %v158
  %v161 = vmul.f32 %v156, %v160
  %v162 = vrcp.pop %v159
  %v163 = vmul.f32 %v157, %v162
  %v164 = vsel %vm148, %v161, 0.0
  %v165 = vsel %vm149, %v163, 0.0
  %v166 = vsub.f32 0.0, %v164
  %v167 = vsub.f32 0.0, %v165
  %v168 = vmul.f32 %v166, 0.5
  %v169 = vmul.f32 %v167, 0.5
  %vm170 = vcmask 7168
  %171 = vst.msk [vmem:[%s6] sm:$0xff] %vm170, %v168
  %172 = vst.msk [vmem:[%s6 + $0x8] sm:$0xff] %vm170, %v169
  %v173 = vsel %vm148, 1, 0
  %v174 = vsel %vm149, 1, 0
  %v175 = vcvt.s32.f32 %v173
  %v176 = vcvt.s32.f32 %v174
  %177 = vst.msk [vmem:[%s7] sm:$0xff] %vm170, %v175
  %178 = vst.msk [vmem:[%s7 + $0x8] sm:$0xff] %vm170, %v176
  // Predicated region
  $region26: #{tpu_custom_call.1} parent=0 // pred_check
    _
  $region27: #{tpu_custom_call.1} parent=0 // pred_check_branch
    %180 = sbr.rel (0) target = $region29
  $region28: #{tpu_custom_call.1} parent=0 // pred_region
    _
  $region29: #{tpu_custom_call.1} parent=0 // pred_fallthru
    _
  // Predicated region
  $region30: #{tpu_custom_call.1} parent=0 // pred_check
    _
  $region31: #{tpu_custom_call.1} parent=0 // pred_check_branch
    %182 = sbr.rel (0) target = $region33
  $region32: #{tpu_custom_call.1} parent=0 // pred_region
    _
  $region33: #{tpu_custom_call.1} parent=0 // pred_fallthru
    _
  // Predicated region
  $region34: #{tpu_custom_call.1} parent=0 // pred_check
    _
  $region35: #{tpu_custom_call.1} parent=0 // pred_check_branch
    %184 = sbr.rel (0) target = $region37
  $region36: #{tpu_custom_call.1} parent=0 // pred_region
    _
  $region37: #{tpu_custom_call.1} parent=0 // pred_fallthru
    _
  // Predicated region
  $region38: #{tpu_custom_call.1} parent=0 // pred_check
    _
  $region39: #{tpu_custom_call.1} parent=0 // pred_check_branch
    %186 = sbr.rel (0) target = $region41
  $region40: #{tpu_custom_call.1} parent=0 // pred_region
    _
  $region41: #{tpu_custom_call.1} parent=0 // pred_fallthru
    _

</llo_original>
